<compile_context>
chip_gen: v7x
topology: tpu7x:2x2x1
jax: 0.10.0
libtpu: 0.0.40
codegen_flags: <defaults>
</compile_context>

<pallas_src>
import jax
import jax.numpy as jnp
from jax.experimental import pallas as pl
from jax.experimental.pallas import tpu as pltpu

KH = KW = 2      # Conv2d kernel_size=2
PAD = 2          # Conv2d padding=2
BN_EPS = 1e-5    # nn.BatchNorm2d default eps


def _resblock_kernel(x_ref, w_ref, shift_ref, o_ref):
    """One grid step = one tile of the batch.

    x_ref     : (bt, Cin)            input pixels (H == W == 1)
    w_ref     : (Cin, Cout*Ho*Wo)    conv taps + BN scale + residual, all folded
    shift_ref : (1,  Cout*Ho*Wo)     folded BN shift (conv bias + beta - mean*scale)
    o_ref     : (bt, Cout*Ho*Wo)     lane-dense output tile (channels slowest)
    """
    y = jnp.dot(x_ref[...], w_ref[...], preferred_element_type=jnp.float32)
    o_ref[...] = jnp.maximum(y + shift_ref[...], 0.0).astype(o_ref.dtype)


def resblock_forward(x, params):
    """x: (N, Cin, 1, 1) float32 NCHW -> (N, Cout, 4, 4) float32 NCHW."""
    w = params["conv_w"]          # (Cout, Cin, 2, 2)
    bias = params["conv_b"]       # (Cout,)
    gamma = params["gamma"]
    beta = params["beta"]
    r_mean = params["running_mean"]
    r_var = params["running_var"]

    n, cin, h, wd = x.shape
    cout = w.shape[0]
    ho, wo = h + 2 * PAD - KH + 1, wd + 2 * PAD - KW + 1   # H+3, W+3

    # PyTorch broadcasting of `residual + conv_out` requires exactly this case.
    if h != 1 or wd != 1:
        raise ValueError("ResBlock residual only broadcasts when H == W == 1")
    if cin not in (1, cout):
        raise ValueError("ResBlock residual requires Cin in {1, Cout}")

    # ---- fold conv taps, BN scale and the residual into one weight matrix ----
    scale = gamma / jnp.sqrt(r_var + BN_EPS)                 # (Cout,)
    shift = beta + (bias - r_mean) * scale                   # (Cout,)

    # The single input pixel sits at padded position (PAD, PAD); output (oh,ow)
    # sees it through tap (PAD-oh, PAD-ow) iff oh,ow in {PAD-1, PAD}.
    w_eff = jnp.zeros((cin, cout, ho, wo), jnp.float32)
    for oh in (PAD - 1, PAD):
        for ow in (PAD - 1, PAD):
            tap = w[:, :, PAD - oh, PAD - ow].astype(jnp.float32)   # (Cout, Cin)
            w_eff = w_eff.at[:, :, oh, ow].set((tap * scale[:, None]).T)

    # Residual add: x (per-image channel vector) broadcast over spatial; it is
    # linear in x so it folds into the same matmul.
    if cin == cout:
        rmat = jnp.eye(cin, dtype=jnp.float32)
    else:  # cin == 1
        rmat = jnp.ones((1, cout), jnp.float32)
    w_eff = w_eff + rmat[:, :, None, None]

    # Packed lane layout: channel slowest, spatial fastest -> the output
    # reshapes straight to (N, Cout, Ho, Wo) with no transpose.
    w_mat = w_eff.reshape(cin, cout * ho * wo)
    shift_full = jnp.repeat(shift.astype(jnp.float32), ho * wo).reshape(1, cout * ho * wo)

    # ---- batch tiling: single step for small N, 256 rows/step otherwise ----
    bt = n if n <= 256 else 256
    n_pad = pl.cdiv(n, bt) * bt

    x_vec = x[:, :, 0, 0].astype(jnp.float32)                # (N, Cin)
    if n_pad != n:
        x_vec = jnp.pad(x_vec, ((0, n_pad - n), (0, 0)))

    grid_spec = pltpu.PrefetchScalarGridSpec(
        num_scalar_prefetch=0,
        grid=(n_pad // bt,),
        in_specs=[
            pl.BlockSpec((bt, cin), lambda i: (i, 0)),
            pl.BlockSpec((cin, cout * ho * wo), lambda i: (0, 0)),
            pl.BlockSpec((1, cout * ho * wo), lambda i: (0, 0)),
        ],
        out_specs=pl.BlockSpec((bt, cout * ho * wo), lambda i: (i, 0)),
    )

    y = pl.pallas_call(
        _resblock_kernel,
        out_shape=jax.ShapeDtypeStruct((n_pad, cout * ho * wo), jnp.float32),
        grid_spec=grid_spec,
        compiler_params=pltpu.CompilerParams(dimension_semantics=("parallel",)),
    )(x_vec, w_mat, shift_full)

    if n_pad != n:
        y = y[:n]
    return y.reshape(n, cout, ho, wo).astype(x.dtype)        # already NCHW


def _reference(x, params):
    """Pure-JAX reference (NCHW) for correctness checking."""
    conv = jax.lax.conv_general_dilated(
        x, params["conv_w"], window_strides=(1, 1),
        padding=((PAD, PAD), (PAD, PAD)),
        dimension_numbers=("NCHW", "OIHW", "NCHW"))
    conv = conv + params["conv_b"][None, :, None, None]
    scale = params["gamma"] / jnp.sqrt(params["running_var"] + BN_EPS)
    bn = (conv - params["running_mean"][None, :, None, None]) \
        * scale[None, :, None, None] + params["beta"][None, :, None, None]
    return jnp.maximum(x + bn, 0.0)   # residual broadcasts (H = W = 1)


if __name__ == "__main__":
    # The module only composes when H == W == 1 (see note at top).
    # N=16, C=32 -> one grid step, M=16, K=32, lane dim 512 (dense stores).
    N, C, H, W = 16, 32, 1, 1
    cin = cout = C

    key = jax.random.PRNGKey(0)
    ks = jax.random.split(key, 7)
    params = dict(
        conv_w=0.1 * jax.random.normal(ks[0], (cout, cin, KH, KW), jnp.float32),
        conv_b=0.1 * jax.random.normal(ks[1], (cout,), jnp.float32),
        gamma=1.0 + 0.1 * jax.random.normal(ks[2], (cout,), jnp.float32),
        beta=0.1 * jax.random.normal(ks[3], (cout,), jnp.float32),
        running_mean=0.1 * jax.random.normal(ks[4], (cout,), jnp.float32),
        running_var=jnp.abs(jax.random.normal(ks[5], (cout,), jnp.float32)) + 0.5,
    )
    x = jax.random.normal(ks[6], (N, cin, H, W), jnp.float32)

    y = jax.block_until_ready(resblock_forward(x, params))
    y_ref = _reference(x, params)

    assert y.shape == (N, cout, H + 3, W + 3), y.shape
    assert jnp.allclose(y, y_ref, atol=1e-5, rtol=1e-5), float(jnp.max(jnp.abs(y - y_ref)))
    print("KERNEL_OK")
</pallas_src>

<mosaic_0001>
module attributes {stable_mosaic.version = 11 : i64} {
  func.func @_resblock_kernel(%arg0: i32, %arg1: memref<16x32xf32, #tpu.memory_space<vmem>>, %arg2: memref<32x512xf32, #tpu.memory_space<vmem>>, %arg3: memref<1x512xf32, #tpu.memory_space<vmem>>, %arg4: memref<16x512xf32, #tpu.memory_space<vmem>>) attributes {dimension_semantics = [#tpu.dimension_semantics<parallel>], iteration_bounds = array<i64: 1>, scalar_prefetch = 0 : i64, scratch_operands = 0 : i64, tpu.core_type = #tpu.core_type<tc>, window_params = [{transform_indices = @transform_0, window_bounds = array<i64: 16, 32>}, {pipeline_mode = #tpu.pipeline_mode<synchronous>, transform_indices = @transform_1, window_bounds = array<i64: 32, 512>}, {pipeline_mode = #tpu.pipeline_mode<synchronous>, transform_indices = @transform_2, window_bounds = array<i64: 1, 512>}, {transform_indices = @transform_3, window_bounds = array<i64: 16, 512>}]} {
    %c0 = arith.constant 0 : index
    %c0_0 = arith.constant 0 : index
    %0 = vector.load %arg1[%c0, %c0_0] : memref<16x32xf32, #tpu.memory_space<vmem>>, vector<16x32xf32>
    %c0_1 = arith.constant 0 : index
    %c0_2 = arith.constant 0 : index
    %1 = vector.load %arg2[%c0_1, %c0_2] : memref<32x512xf32, #tpu.memory_space<vmem>>, vector<32x512xf32>
    %cst = arith.constant dense<0.000000e+00> : vector<16x512xf32>
    %2 = tpu.matmul %0, %1, %cst {dimension_numbers = #tpu.dot_dimension_numbers<[1], [0], [0], [1], [0, 0, 1, 1], [], []>} : vector<16x32xf32>, vector<32x512xf32>, vector<16x512xf32> -> vector<16x512xf32>
    %c0_3 = arith.constant 0 : index
    %c0_4 = arith.constant 0 : index
    %3 = vector.load %arg3[%c0_3, %c0_4] : memref<1x512xf32, #tpu.memory_space<vmem>>, vector<1x512xf32>
    %4 = vector.broadcast %3 : vector<1x512xf32> to vector<16x512xf32>
    %5 = arith.addf %2, %4 : vector<16x512xf32>
    %cst_5 = arith.constant 0.000000e+00 : f32
    %6 = vector.broadcast %cst_5 : f32 to vector<16x512xf32>
    %7 = arith.maximumf %5, %6 : vector<16x512xf32>
    %c0_6 = arith.constant 0 : index
    %c0_7 = arith.constant 0 : index
    %8 = vector.load %arg4[%c0_6, %c0_7] : memref<16x512xf32, #tpu.memory_space<vmem>>, vector<16x512xf32>
    tpu.vector_store %arg4[%c0_6, %c0_7], %7 {strides = array<i32>} : memref<16x512xf32, #tpu.memory_space<vmem>>, vector<16x512xf32>,
    return
  }
  func.func @transform_0(%arg0: i32) -> (i32, i32) {
    %c0_i32 = arith.constant 0 : i32
    %c0_i32_0 = arith.constant 0 : i32
    return %arg0, %c0_i32 : i32, i32
  }
  func.func @transform_1(%arg0: i32) -> (i32, i32) {
    %c0_i32 = arith.constant 0 : i32
    %c0_i32_0 = arith.constant 0 : i32
    %c0_i32_1 = arith.constant 0 : i32
    return %c0_i32, %c0_i32_0 : i32, i32
  }
  func.func @transform_2(%arg0: i32) -> (i32, i32) {
    %c0_i32 = arith.constant 0 : i32
    %c0_i32_0 = arith.constant 0 : i32
    %c0_i32_1 = arith.constant 0 : i32
    return %c0_i32, %c0_i32_0 : i32, i32
  }
  func.func @transform_3(%arg0: i32) -> (i32, i32) {
    %c0_i32 = arith.constant 0 : i32
    %c0_i32_0 = arith.constant 0 : i32
    return %arg0, %c0_i32 : i32, i32
  }
}

</mosaic_0001>

<llo_original>
// kernel: tpu_custom_call.1
$region0: #{tpu_custom_call.1}
  #allocation0 [shape = 'u32[]', space=smem, size = 0x4, offset = 0x4, fixed_abs, tag = 'smem constant byte address 0x4 - core index']
  #allocation1 [shape = 'u32[144,128]{1,0:T(1,128)}', space=vmem, size = 0x12000, scoped, tag = 'internal scratch']
  %s0 = inlined_call_operand.hbm [shape: f32[16,32], index: 0, kind: input, shape index: {}]
  %s1 = inlined_call_operand.hbm [shape: f32[32,512], index: 1, kind: input, shape index: {}]
  %s2 = inlined_call_operand.vmem [shape: f32[1,512], index: 2, kind: input, shape index: {}]
  %s3 = inlined_call_operand.hbm [shape: f32[16,512], index: 3, kind: output, shape index: {}]
  %s4 = sld [smem:[#allocation0]]
  $region30: #{tpu_custom_call.1} parent=0
    _
  %s6 = ssub.s32 1, %s4
  %s7 = scalar_select 0, %s6, %s4
  $region1: #{tpu_custom_call.1} parent=0
    #allocation2 [shape = 'u8[8192]{0}', space=vmem, size = 0x2000, scoped, tag = 'input window, operand 0, single buffered']
    #allocation3 [shape = 's32[1]{0}', space=sflag, size = 0x4, scoped, tag = 'scoped memory for tpu_custom_call.1']
    #allocation4 [shape = 's32[1]{0}', space=sflag, size = 0x4, scoped, tag = 'scoped memory for tpu_custom_call.1']
    #allocation5 [shape = 'u8[65536]{0}', space=vmem, size = 0x10000, scoped, tag = 'input window, operand 1, single buffered']
    #allocation6 [shape = 's32[1]{0}', space=sflag, size = 0x4, scoped, tag = 'scoped memory for tpu_custom_call.1']
    #allocation7 [shape = 'u8[32768]{0}', space=vmem, size = 0x8000, scoped, tag = 'output window, operand 0, single buffered']
    %8 = vsyncpa [#allocation3], 0
    %9 = vsyncpa [#allocation6], 0
    %10 = vsyncpa [#allocation4], 0
    // Predicated region
    $region2: #{tpu_custom_call.1} parent=1 // pred_check
      _
    $region3: #{tpu_custom_call.1} parent=1 // pred_check_branch
      %12 = sbr.rel (0) target = $region5
    $region4: #{tpu_custom_call.1} parent=1 // pred_region
      %s14 = ssub.s32 256, 256
      %15 = vsyncadd [#allocation3], %s14
      %s16 = sshll.u32 [#allocation2], 4
      %s17 = int_to_ptr.vmem [resolvable:$true] %s16
      %22 = dma.hbm_to_vmem [thread:$0]  %s0, 256, %s17, [#allocation3], 128, 128, 8
    $region5: #{tpu_custom_call.1} parent=1 // pred_fallthru
      _
    // Predicated region
    $region6: #{tpu_custom_call.1} parent=1 // pred_check
      _
    $region7: #{tpu_custom_call.1} parent=1 // pred_check_branch
      %24 = sbr.rel (0) target = $region9
    $region8: #{tpu_custom_call.1} parent=1 // pred_region
      %s26 = ssub.s32 2048, 2048
      %27 = vsyncadd [#allocation6], %s26
      %s28 = sshll.u32 [#allocation5], 4
      %s29 = int_to_ptr.vmem [resolvable:$true] %s28
      %34 = dma.hbm_to_vmem [thread:$0]  %s1, 2048, %s29, [#allocation6], 512, 512, 32
    $region9: #{tpu_custom_call.1} parent=1 // pred_fallthru
      _
    // Predicated region
    $region10: #{tpu_custom_call.1} parent=1 // pred_check
      _
    $region11: #{tpu_custom_call.1} parent=1 // pred_check_branch
      %36 = sbr.rel (0) target = $region13
    $region12: #{tpu_custom_call.1} parent=1 // pred_region
      _
    $region13: #{tpu_custom_call.1} parent=1 // pred_fallthru
      _
    // Predicated region
    $region14: #{tpu_custom_call.1} parent=1 // pred_check
      _
    $region15: #{tpu_custom_call.1} parent=1 // pred_check_branch
      %38 = sbr.rel (0) target = $region17
    $region16: #{tpu_custom_call.1} parent=1 // pred_region
      %39 = dma.done [#allocation3], 256
    $region17: #{tpu_custom_call.1} parent=1 // pred_fallthru
      _
    // Predicated region
    $region18: #{tpu_custom_call.1} parent=1 // pred_check
      _
    $region19: #{tpu_custom_call.1} parent=1 // pred_check_branch
      %41 = sbr.rel (0) target = $region21
    $region20: #{tpu_custom_call.1} parent=1 // pred_region
      %42 = dma.done [#allocation6], 2048
    $region21: #{tpu_custom_call.1} parent=1 // pred_fallthru
      _
    %v43 = vld [vmem:[#allocation2] sm:$0xff]
    %v44 = vld [vmem:[#allocation2 + $0x8] sm:$0xff]
    %v45 = vld [vmem:[#allocation5] sm:$0xff]
    %v46 = vld [vmem:[#allocation5 + $0x8] sm:$0xff]
    %v47 = vld [vmem:[#allocation5 + $0x10] sm:$0xff]
    %v48 = vld [vmem:[#allocation5 + $0x18] sm:$0xff]
    %v49 = vld [vmem:[#allocation5 + $0x20] sm:$0xff]
    %v50 = vld [vmem:[#allocation5 + $0x28] sm:$0xff]
    %v51 = vld [vmem:[#allocation5 + $0x30] sm:$0xff]
    %v52 = vld [vmem:[#allocation5 + $0x38] sm:$0xff]
    %v53 = vld [vmem:[#allocation5 + $0x40] sm:$0xff]
    %v54 = vld [vmem:[#allocation5 + $0x48] sm:$0xff]
    %v55 = vld [vmem:[#allocation5 + $0x50] sm:$0xff]
    %v56 = vld [vmem:[#allocation5 + $0x58] sm:$0xff]
    %v57 = vld [vmem:[#allocation5 + $0x60] sm:$0xff]
    %v58 = vld [vmem:[#allocation5 + $0x68] sm:$0xff]
    %v59 = vld [vmem:[#allocation5 + $0x70] sm:$0xff]
    %v60 = vld [vmem:[#allocation5 + $0x78] sm:$0xff]
    %v61 = vld [vmem:[%s2] sm:$0xf]
    %v63 = vlaneseq
    %v64 = vshrl.u32 %v63, 7
    %v65 = vsub.s32 0, %v64
    %v66 = vrot.slane %v61, %v65
    %v67 = vlaneseq
    %v68 = vshrl.u32 %v67, 7
    %v69 = vsub.s32 1, %v68
    %v70 = vrot.slane %v61, %v69
    %v71 = vlaneseq
    %v72 = vshrl.u32 %v71, 7
    %v73 = vsub.s32 2, %v72
    %v74 = vrot.slane %v61, %v73
    %v75 = vlaneseq
    %v76 = vshrl.u32 %v75, 7
    %v77 = vsub.s32 3, %v76
    %v78 = vrot.slane %v61, %v77
    %vm83 = vcmask 261120
    %v85 = vsel %vm83, %v43, 0
    %v88 = vsel %vm83, %v44, 0
    %90 = vmatprep.subr.mxu0 %v46
    %91 = vmatpush1.msra.mxu0 %v45
    %92 = vmatprep.subr.mxu0 %v50
    %93 = vmatpush1.msra.mxu0 %v49
    %94 = vmatprep.subr.mxu0 %v54
    %95 = vmatpush1.msra.mxu0 %v53
    %96 = vmatprep.subr.mxu0 %v58
    %97 = vmatpush1.msra.mxu0 %v57
    %98 = vmatprep.subr.mxu0 0.0
    %99 = vmatpush1.msra.mxu0 0.0
    %100 = vmatprep.subr.mxu0 0.0
    %101 = vmatpush1.msra.mxu0 0.0
    %102 = vmatprep.subr.mxu0 0.0
    %103 = vmatpush1.msra.mxu0 0.0
    %104 = vmatprep.subr.mxu0 0.0
    %105 = vmatpush1.msra.mxu0 0.0
    %106 = vmatprep.subr.mxu0 0.0
    %107 = vmatpush1.msra.mxu0 0.0
    %108 = vmatprep.subr.mxu0 0.0
    %109 = vmatpush1.msra.mxu0 0.0
    %110 = vmatprep.subr.mxu0 0.0
    %111 = vmatpush1.msra.mxu0 0.0
    %112 = vmatprep.subr.mxu0 0.0
    %113 = vmatpush1.msra.mxu0 0.0
    %114 = vmatprep.subr.mxu0 0.0
    %115 = vmatpush1.msra.mxu0 0.0
    %116 = vmatprep.subr.mxu0 0.0
    %117 = vmatpush1.msra.mxu0 0.0
    %118 = vmatprep.subr.mxu0 0.0
    %119 = vmatpush1.msra.mxu0 0.0
    %120 = vmatprep.subr.mxu0 0.0
    %121 = vmatpush1.msra.mxu0 0.0
    %122 = vmatprep.subr.mxu0 0.0
    %123 = vmatpush1.msra.mxu0 0.0
    %124 = vmatprep.subr.mxu0 0.0
    %125 = vmatpush1.msra.mxu0 0.0
    %126 = vmatprep.subr.mxu0 0.0
    %127 = vmatpush1.msra.mxu0 0.0
    %128 = vmatprep.subr.mxu0 0.0
    %129 = vmatpush1.msra.mxu0 0.0
    %130 = vmatprep.subr.mxu0 0.0
    %131 = vmatpush1.msra.mxu0 0.0
    %132 = vmatprep.subr.mxu0 0.0
    %133 = vmatpush1.msra.mxu0 0.0
    %134 = vmatprep.subr.mxu0 0.0
    %135 = vmatpush1.msra.mxu0 0.0
    %136 = vmatprep.subr.mxu0 0.0
    %137 = vmatpush1.msra.mxu0 0.0
    %138 = vmatprep.subr.mxu0 0.0
    %139 = vmatpush1.msra.mxu0 0.0
    %140 = vmatprep.subr.mxu0 0.0
    %141 = vmatpush1.msra.mxu0 0.0
    %142 = vmatprep.subr.mxu0 0.0
    %143 = vmatpush1.msra.mxu0 0.0
    %144 = vmatprep.subr.mxu0 0.0
    %145 = vmatpush1.msra.mxu0 0.0
    %146 = vmatprep.subr.mxu0 0.0
    %147 = vmatpush1.msra.mxu0 0.0
    %148 = vmatprep.subr.mxu0 0.0
    %149 = vmatpush1.msra.mxu0 0.0
    %150 = vmatprep.subr.mxu0 0.0
    %151 = vmatpush1.msra.mxu0 0.0
    %152 = vmatprep.subr.mxu0 0.0
    %153 = vmatpush1.msra.mxu0 0.0
    %154 = vmatprep.mubr.f32.mxu0 0.0
    %155 = vmatmul.mubr.f32.gmra.mrb[0].mxu0 %v85
    %v156 = vpop.f32.mrb[0].mxu0
    %v157 = vadd.f32 %v66, %v156
    %v158 = vpop.f32.mrb[0].mxu0
    %v159 = vadd.f32 %v70, %v158
    %160 = vmatprep.mubr.f32.mxu0 0.0
    %161 = vmatmul.mubr.f32.gmra.mrb[0].mxu0 %v88
    %v162 = vpop.f32.mrb[0].mxu0
    %v163 = vadd.f32 %v66, %v162
    %v164 = vpop.f32.mrb[0].mxu0
    %v165 = vadd.f32 %v70, %v164
    %166 = vdwg.mxu0
    %167 = vmatprep.subr.mxu0 %v48
    %168 = vmatpush1.msra.mxu0 %v47
    %169 = vmatprep.subr.mxu0 %v52
    %170 = vmatpush1.msra.mxu0 %v51
    %171 = vmatprep.subr.mxu0 %v56
    %172 = vmatpush1.msra.mxu0 %v55
    %173 = vmatprep.subr.mxu0 %v60
    %174 = vmatpush1.msra.mxu0 %v59
    %175 = vmatprep.subr.mxu0 0.0
    %176 = vmatpush1.msra.mxu0 0.0
    %177 = vmatprep.subr.mxu0 0.0
    %178 = vmatpush1.msra.mxu0 0.0
    %179 = vmatprep.subr.mxu0 0.0
    %180 = vmatpush1.msra.mxu0 0.0
    %181 = vmatprep.subr.mxu0 0.0
    %182 = vmatpush1.msra.mxu0 0.0
    %183 = vmatprep.subr.mxu0 0.0
    %184 = vmatpush1.msra.mxu0 0.0
    %185 = vmatprep.subr.mxu0 0.0
    %186 = vmatpush1.msra.mxu0 0.0
    %187 = vmatprep.subr.mxu0 0.0
    %188 = vmatpush1.msra.mxu0 0.0
    %189 = vmatprep.subr.mxu0 0.0
    %190 = vmatpush1.msra.mxu0 0.0
    %191 = vmatprep.subr.mxu0 0.0
    %192 = vmatpush1.msra.mxu0 0.0
    %193 = vmatprep.subr.mxu0 0.0
    %194 = vmatpush1.msra.mxu0 0.0
    %195 = vmatprep.subr.mxu0 0.0
    %196 = vmatpush1.msra.mxu0 0.0
    %197 = vmatprep.subr.mxu0 0.0
    %198 = vmatpush1.msra.mxu0 0.0
    %199 = vmatprep.subr.mxu0 0.0
    %200 = vmatpush1.msra.mxu0 0.0
    %201 = vmatprep.subr.mxu0 0.0
    %202 = vmatpush1.msra.mxu0 0.0
    %203 = vmatprep.subr.mxu0 0.0
    %204 = vmatpush1.msra.mxu0 0.0
    %205 = vmatprep.subr.mxu0 0.0
    %206 = vmatpush1.msra.mxu0 0.0
    %207 = vmatprep.subr.mxu0 0.0
    %208 = vmatpush1.msra.mxu0 0.0
    %209 = vmatprep.subr.mxu0 0.0
    %210 = vmatpush1.msra.mxu0 0.0
    %211 = vmatprep.subr.mxu0 0.0
    %212 = vmatpush1.msra.mxu0 0.0
    %213 = vmatprep.subr.mxu0 0.0
    %214 = vmatpush1.msra.mxu0 0.0
    %215 = vmatprep.subr.mxu0 0.0
    %216 = vmatpush1.msra.mxu0 0.0
    %217 = vmatprep.subr.mxu0 0.0
    %218 = vmatpush1.msra.mxu0 0.0
    %219 = vmatprep.subr.mxu0 0.0
    %220 = vmatpush1.msra.mxu0 0.0
    %221 = vmatprep.subr.mxu0 0.0
    %222 = vmatpush1.msra.mxu0 0.0
    %223 = vmatprep.subr.mxu0 0.0
    %224 = vmatpush1.msra.mxu0 0.0
    %225 = vmatprep.subr.mxu0 0.0
    %226 = vmatpush1.msra.mxu0 0.0
    %227 = vmatprep.subr.mxu0 0.0
    %228 = vmatpush1.msra.mxu0 0.0
    %229 = vmatprep.subr.mxu0 0.0
    %230 = vmatpush1.msra.mxu0 0.0
    %231 = vmatprep.mubr.f32.mxu0 0.0
    %232 = vmatmul.mubr.f32.gmra.mrb[0].mxu0 %v85
    %v233 = vpop.f32.mrb[0].mxu0
    %v234 = vadd.f32 %v74, %v233
    %v235 = vpop.f32.mrb[0].mxu0
    %v236 = vadd.f32 %v78, %v235
    %237 = vmatprep.mubr.f32.mxu0 0.0
    %238 = vmatmul.mubr.f32.gmra.mrb[0].mxu0 %v88
    %v239 = vpop.f32.mrb[0].mxu0
    %v240 = vadd.f32 %v74, %v239
    %v241 = vpop.f32.mrb[0].mxu0
    %v242 = vadd.f32 %v78, %v241
    %243 = vdwg.mxu0
    %v244 = vmax.f32 %v157, 0.0
    %v245 = vmax.f32 %v159, 0.0
    %v246 = vmax.f32 %v234, 0.0
    %v247 = vmax.f32 %v236, 0.0
    %v248 = vmax.f32 %v163, 0.0
    %v249 = vmax.f32 %v165, 0.0
    %v250 = vmax.f32 %v240, 0.0
    %v251 = vmax.f32 %v242, 0.0
    %252 = vst [vmem:[#allocation7] sm:$0xff] %v244
    %253 = vst [vmem:[#allocation7 + $0x8] sm:$0xff] %v245
    %254 = vst [vmem:[#allocation7 + $0x10] sm:$0xff] %v246
    %255 = vst [vmem:[#allocation7 + $0x18] sm:$0xff] %v247
    %256 = vst [vmem:[#allocation7 + $0x20] sm:$0xff] %v248
    %257 = vst [vmem:[#allocation7 + $0x28] sm:$0xff] %v249
    %258 = vst [vmem:[#allocation7 + $0x30] sm:$0xff] %v250
    %259 = vst [vmem:[#allocation7 + $0x38] sm:$0xff] %v251
    // Predicated region
    $region22: #{tpu_custom_call.1} parent=1 // pred_check
      _
    $region23: #{tpu_custom_call.1} parent=1 // pred_check_branch
      %261 = sbr.rel (0) target = $region25
    $region24: #{tpu_custom_call.1} parent=1 // pred_region
      %s263 = ssub.s32 1024, 1024
      %264 = vsyncadd [#allocation4], %s263
      %s265 = sshll.u32 [#allocation7], 4
      %s266 = int_to_ptr.vmem [resolvable:$true] %s265
      %271 = dma.vmem_to_hbm [thread:$0]  %s266, 1024, %s3, [#allocation4], 512, 512, 32
    $region25: #{tpu_custom_call.1} parent=1 // pred_fallthru
      _
    // Predicated region
    $region26: #{tpu_custom_call.1} parent=1 // pred_check
      _
    $region27: #{tpu_custom_call.1} parent=1 // pred_check_branch
      %273 = sbr.rel (0) target = $region29
    $region28: #{tpu_custom_call.1} parent=1 // pred_region
      %274 = dma.done [#allocation4], 1024
    $region29: #{tpu_custom_call.1} parent=1 // pred_fallthru
      _
    %275 = vsyncpa [#allocation3], 1
    %276 = vsyncpa [#allocation6], 1
    %277 = vsyncpa [#allocation4], 1

</llo_original>
